<compile_context>
chip_gen: v6e
topology: v6e:2x2x1
jax: 0.10.0
libtpu: 0.0.40
codegen_flags: <defaults>
</compile_context>

<pallas_src>
import jax
import jax.numpy as jnp
from jax.experimental import pallas as pl
from jax.experimental.pallas import tpu as pltpu


def _round_up(n: int, m: int) -> int:
    return pl.cdiv(n, m) * m


def nest_mlp_kernel(x_ref, w1_ref, b1_ref, w2_ref, b2_ref, w3_ref, b3_ref, o_ref):
    # Feature-major: x is (20, TILE_B); batch lives on the lane axis.
    x = x_ref[...]                                                        # (20, TB)

    h1 = jnp.dot(w1_ref[...], x, preferred_element_type=jnp.float32)     # (64, TB)
    h1 = jnp.maximum(h1 + b1_ref[...], 0.0)                              # f32 epilogue

    h2 = jnp.dot(w2_ref[...], h1.astype(w2_ref.dtype),
                 preferred_element_type=jnp.float32)                     # (32, TB)
    h2 = jnp.maximum(h2 + b2_ref[...], 0.0)

    y = jnp.dot(w3_ref[...], h2.astype(w3_ref.dtype),
                preferred_element_type=jnp.float32)                      # (16, TB)
    o_ref[...] = (y + b3_ref[...]).astype(o_ref.dtype)                   # lane-dense store


def nest_mlp(x, w1, b1, w2, b2, w3, b3, *, tile_b=1024):
    """x: (B, 20).  w_i: (out, in) torch layout.  b_i: (out, 1).  Returns (B, 16)."""
    B, d_in = x.shape
    d_out = w3.shape[0]

    # Batch tile: multiple of 128 lanes, capped so tiny batches pad minimally.
    tile_b = min(tile_b, _round_up(max(B, 1), 128))
    b_pad = _round_up(B, tile_b)

    # Layout plumbing in the wrapper: feature-major activations, zero-pad batch.
    xt = x.T                                                              # (20, B)
    if b_pad != B:
        xt = jnp.pad(xt, ((0, 0), (0, b_pad - B)))                        # (20, b_pad)

    grid = (b_pad // tile_b,)

    def resident(a):
        # Constant index_map: whole array lives in VMEM for every grid step.
        return pl.BlockSpec(a.shape, lambda i: (0,) * a.ndim)

    out_t = pl.pallas_call(
        nest_mlp_kernel,
        out_shape=jax.ShapeDtypeStruct((d_out, b_pad), x.dtype),
        grid=grid,
        in_specs=[
            pl.BlockSpec((d_in, tile_b), lambda i: (0, i)),               # x tile (pipelined)
            resident(w1), resident(b1),
            resident(w2), resident(b2),
            resident(w3), resident(b3),
        ],
        out_specs=pl.BlockSpec((d_out, tile_b), lambda i: (0, i)),
        compiler_params=pltpu.CompilerParams(
            dimension_semantics=("parallel",),                            # 2x on v7x megacore
        ),
    )(xt, w1, b1, w2, b2, w3, b3)

    return out_t[:, :B].T                                                 # (B, 16)


def init_linear(key, in_features, out_features, dtype=jnp.float32):
    # Mimic torch.nn.Linear default init: U(-1/sqrt(fan_in), 1/sqrt(fan_in)).
    # Weight in torch-native (out_features, in_features) layout, bias (out, 1).
    kw, kb = jax.random.split(key)
    bound = 1.0 / jnp.sqrt(in_features)
    w = jax.random.uniform(kw, (out_features, in_features), dtype, -bound, bound)
    b = jax.random.uniform(kb, (out_features, 1), dtype, -bound, bound)
    return w, b


if __name__ == "__main__":
    key = jax.random.PRNGKey(0)
    k_x, k1, k2, k3 = jax.random.split(key, 4)

    batch = 2
    # NestMLP's first Linear expects 20 input features (the spec's X=(2,4) would
    # not type-check against Linear(20, 64)), so the demo uses (2, 20).
    x = jax.random.uniform(k_x, (batch, 20), jnp.float32)

    w1, b1 = init_linear(k1, 20, 64)
    w2, b2 = init_linear(k2, 64, 32)
    w3, b3 = init_linear(k3, 32, 16)

    out = nest_mlp(x, w1, b1, w2, b2, w3, b3)
    out = jax.block_until_ready(out)

    # Pure-JAX reference of the same forward pass (batch-major, torch layout).
    ref = jnp.maximum(x @ w1.T + b1.T, 0.0)
    ref = jnp.maximum(ref @ w2.T + b2.T, 0.0)
    ref = ref @ w3.T + b3.T

    assert out.shape == (batch, 16)
    assert jnp.allclose(out, ref, atol=1e-5, rtol=1e-5)

    print("KERNEL_OK")
</pallas_src>

<mosaic_0001>
module attributes {stable_mosaic.version = 11 : i64} {
  func.func @nest_mlp_kernel(%arg0: i32, %arg1: memref<20x128xf32, #tpu.memory_space<vmem>>, %arg2: memref<64x20xf32, #tpu.memory_space<vmem>>, %arg3: memref<64x1xf32, #tpu.memory_space<vmem>>, %arg4: memref<32x64xf32, #tpu.memory_space<vmem>>, %arg5: memref<32x1xf32, #tpu.memory_space<vmem>>, %arg6: memref<16x32xf32, #tpu.memory_space<vmem>>, %arg7: memref<16x1xf32, #tpu.memory_space<vmem>>, %arg8: memref<16x128xf32, #tpu.memory_space<vmem>>) attributes {dimension_semantics = [#tpu.dimension_semantics<parallel>], iteration_bounds = array<i64: 1>, scalar_prefetch = 0 : i64, scratch_operands = 0 : i64, tpu.core_type = #tpu.core_type<tc>, window_params = [{transform_indices = @transform_0, window_bounds = array<i64: 20, 128>}, {pipeline_mode = #tpu.pipeline_mode<synchronous>, transform_indices = @transform_1, window_bounds = array<i64: 64, 20>}, {pipeline_mode = #tpu.pipeline_mode<synchronous>, transform_indices = @transform_2, window_bounds = array<i64: 64, 1>}, {pipeline_mode = #tpu.pipeline_mode<synchronous>, transform_indices = @transform_3, window_bounds = array<i64: 32, 64>}, {pipeline_mode = #tpu.pipeline_mode<synchronous>, transform_indices = @transform_4, window_bounds = array<i64: 32, 1>}, {pipeline_mode = #tpu.pipeline_mode<synchronous>, transform_indices = @transform_5, window_bounds = array<i64: 16, 32>}, {pipeline_mode = #tpu.pipeline_mode<synchronous>, transform_indices = @transform_6, window_bounds = array<i64: 16, 1>}, {transform_indices = @transform_7, window_bounds = array<i64: 16, 128>}]} {
    %c0 = arith.constant 0 : index
    %c0_0 = arith.constant 0 : index
    %0 = vector.load %arg1[%c0, %c0_0] : memref<20x128xf32, #tpu.memory_space<vmem>>, vector<20x128xf32>
    %c0_1 = arith.constant 0 : index
    %c0_2 = arith.constant 0 : index
    %1 = vector.load %arg2[%c0_1, %c0_2] : memref<64x20xf32, #tpu.memory_space<vmem>>, vector<64x20xf32>
    %cst = arith.constant dense<0.000000e+00> : vector<64x128xf32>
    %2 = tpu.matmul %1, %0, %cst {dimension_numbers = #tpu.dot_dimension_numbers<[1], [0], [0], [1], [0, 0, 1, 1], [], []>} : vector<64x20xf32>, vector<20x128xf32>, vector<64x128xf32> -> vector<64x128xf32>
    %c0_3 = arith.constant 0 : index
    %c0_4 = arith.constant 0 : index
    %3 = vector.load %arg3[%c0_3, %c0_4] : memref<64x1xf32, #tpu.memory_space<vmem>>, vector<64x1xf32>
    %4 = vector.broadcast %3 : vector<64x1xf32> to vector<64x128xf32>
    %5 = arith.addf %2, %4 : vector<64x128xf32>
    %cst_5 = arith.constant 0.000000e+00 : f32
    %6 = vector.broadcast %cst_5 : f32 to vector<64x128xf32>
    %7 = arith.maximumf %5, %6 : vector<64x128xf32>
    %c0_6 = arith.constant 0 : index
    %c0_7 = arith.constant 0 : index
    %8 = vector.load %arg4[%c0_6, %c0_7] : memref<32x64xf32, #tpu.memory_space<vmem>>, vector<32x64xf32>
    %cst_8 = arith.constant dense<0.000000e+00> : vector<32x128xf32>
    %9 = tpu.matmul %8, %7, %cst_8 {dimension_numbers = #tpu.dot_dimension_numbers<[1], [0], [0], [1], [0, 0, 1, 1], [], []>} : vector<32x64xf32>, vector<64x128xf32>, vector<32x128xf32> -> vector<32x128xf32>
    %c0_9 = arith.constant 0 : index
    %c0_10 = arith.constant 0 : index
    %10 = vector.load %arg5[%c0_9, %c0_10] : memref<32x1xf32, #tpu.memory_space<vmem>>, vector<32x1xf32>
    %11 = vector.broadcast %10 : vector<32x1xf32> to vector<32x128xf32>
    %12 = arith.addf %9, %11 : vector<32x128xf32>
    %cst_11 = arith.constant 0.000000e+00 : f32
    %13 = vector.broadcast %cst_11 : f32 to vector<32x128xf32>
    %14 = arith.maximumf %12, %13 : vector<32x128xf32>
    %c0_12 = arith.constant 0 : index
    %c0_13 = arith.constant 0 : index
    %15 = vector.load %arg6[%c0_12, %c0_13] : memref<16x32xf32, #tpu.memory_space<vmem>>, vector<16x32xf32>
    %cst_14 = arith.constant dense<0.000000e+00> : vector<16x128xf32>
    %16 = tpu.matmul %15, %14, %cst_14 {dimension_numbers = #tpu.dot_dimension_numbers<[1], [0], [0], [1], [0, 0, 1, 1], [], []>} : vector<16x32xf32>, vector<32x128xf32>, vector<16x128xf32> -> vector<16x128xf32>
    %c0_15 = arith.constant 0 : index
    %c0_16 = arith.constant 0 : index
    %17 = vector.load %arg7[%c0_15, %c0_16] : memref<16x1xf32, #tpu.memory_space<vmem>>, vector<16x1xf32>
    %18 = vector.broadcast %17 : vector<16x1xf32> to vector<16x128xf32>
    %19 = arith.addf %16, %18 : vector<16x128xf32>
    %c0_17 = arith.constant 0 : index
    %c0_18 = arith.constant 0 : index
    %20 = vector.load %arg8[%c0_17, %c0_18] : memref<16x128xf32, #tpu.memory_space<vmem>>, vector<16x128xf32>
    tpu.vector_store %arg8[%c0_17, %c0_18], %19 {strides = array<i32>} : memref<16x128xf32, #tpu.memory_space<vmem>>, vector<16x128xf32>,
    return
  }
  func.func @transform_0(%arg0: i32) -> (i32, i32) {
    %c0_i32 = arith.constant 0 : i32
    %c0_i32_0 = arith.constant 0 : i32
    return %c0_i32, %arg0 : i32, i32
  }
  func.func @transform_1(%arg0: i32) -> (i32, i32) {
    %c0_i32 = arith.constant 0 : i32
    %c0_i32_0 = arith.constant 0 : i32
    %c0_i32_1 = arith.constant 0 : i32
    return %c0_i32, %c0_i32_0 : i32, i32
  }
  func.func @transform_2(%arg0: i32) -> (i32, i32) {
    %c0_i32 = arith.constant 0 : i32
    %c0_i32_0 = arith.constant 0 : i32
    %c0_i32_1 = arith.constant 0 : i32
    return %c0_i32, %c0_i32_0 : i32, i32
  }
  func.func @transform_3(%arg0: i32) -> (i32, i32) {
    %c0_i32 = arith.constant 0 : i32
    %c0_i32_0 = arith.constant 0 : i32
    %c0_i32_1 = arith.constant 0 : i32
    return %c0_i32, %c0_i32_0 : i32, i32
  }
  func.func @transform_4(%arg0: i32) -> (i32, i32) {
    %c0_i32 = arith.constant 0 : i32
    %c0_i32_0 = arith.constant 0 : i32
    %c0_i32_1 = arith.constant 0 : i32
    return %c0_i32, %c0_i32_0 : i32, i32
  }
  func.func @transform_5(%arg0: i32) -> (i32, i32) {
    %c0_i32 = arith.constant 0 : i32
    %c0_i32_0 = arith.constant 0 : i32
    %c0_i32_1 = arith.constant 0 : i32
    return %c0_i32, %c0_i32_0 : i32, i32
  }
  func.func @transform_6(%arg0: i32) -> (i32, i32) {
    %c0_i32 = arith.constant 0 : i32
    %c0_i32_0 = arith.constant 0 : i32
    %c0_i32_1 = arith.constant 0 : i32
    return %c0_i32, %c0_i32_0 : i32, i32
  }
  func.func @transform_7(%arg0: i32) -> (i32, i32) {
    %c0_i32 = arith.constant 0 : i32
    %c0_i32_0 = arith.constant 0 : i32
    return %c0_i32, %arg0 : i32, i32
  }
}

</mosaic_0001>

<llo_original>
// kernel: tpu_custom_call.1
$region0: #{tpu_custom_call.1}
  #allocation0 [shape = 'u32[]', space=smem, size = 0x4, offset = 0x4, fixed_abs, tag = 'smem constant byte address 0x4 - core index']
  #allocation1 [shape = 'u32[144,128]{1,0:T(1,128)}', space=vmem, size = 0x12000, scoped, tag = 'internal scratch']
  %s0 = inlined_call_operand.vmem [shape: f32[20,128], index: 0, kind: input, shape index: {}]
  %s1 = inlined_call_operand.vmem [shape: f32[64,20], index: 1, kind: input, shape index: {}]
  %s2 = inlined_call_operand.vmem [shape: f32[64,1], index: 2, kind: input, shape index: {}]
  %s3 = inlined_call_operand.vmem [shape: f32[32,64], index: 3, kind: input, shape index: {}]
  %s4 = inlined_call_operand.vmem [shape: f32[32,1], index: 4, kind: input, shape index: {}]
  %s5 = inlined_call_operand.vmem [shape: f32[16,32], index: 5, kind: input, shape index: {}]
  %s6 = inlined_call_operand.vmem [shape: f32[16,1], index: 6, kind: input, shape index: {}]
  %s7 = inlined_call_operand.hbm [shape: f32[16,128], index: 7, kind: output, shape index: {}]
  %s8 = sld [smem:[#allocation0]]
  $region38: #{tpu_custom_call.1} parent=0
    _
  %s10 = ssub.s32 1, %s8
  %s11 = scalar_select 0, %s10, %s8
  $region1: #{tpu_custom_call.1} parent=0
    #allocation2 [shape = 'u8[8192]{0}', space=vmem, size = 0x2000, scoped, tag = 'output window, operand 0, single buffered']
    #allocation3 [shape = 's32[1]{0}', space=sflag, size = 0x4, scoped, tag = 'scoped memory for tpu_custom_call.1']
    %12 = vsyncpa [#allocation3], 0
    // Predicated region
    $region2: #{tpu_custom_call.1} parent=1 // pred_check
      _
    $region3: #{tpu_custom_call.1} parent=1 // pred_check_branch
      %14 = sbr.rel (0) target = $region5
    $region4: #{tpu_custom_call.1} parent=1 // pred_region
      _
    $region5: #{tpu_custom_call.1} parent=1 // pred_fallthru
      _
    // Predicated region
    $region6: #{tpu_custom_call.1} parent=1 // pred_check
      _
    $region7: #{tpu_custom_call.1} parent=1 // pred_check_branch
      %16 = sbr.rel (0) target = $region9
    $region8: #{tpu_custom_call.1} parent=1 // pred_region
      _
    $region9: #{tpu_custom_call.1} parent=1 // pred_fallthru
      _
    // Predicated region
    $region10: #{tpu_custom_call.1} parent=1 // pred_check
      _
    $region11: #{tpu_custom_call.1} parent=1 // pred_check_branch
      %18 = sbr.rel (0) target = $region13
    $region12: #{tpu_custom_call.1} parent=1 // pred_region
      _
    $region13: #{tpu_custom_call.1} parent=1 // pred_fallthru
      _
    // Predicated region
    $region14: #{tpu_custom_call.1} parent=1 // pred_check
      _
    $region15: #{tpu_custom_call.1} parent=1 // pred_check_branch
      %20 = sbr.rel (0) target = $region17
    $region16: #{tpu_custom_call.1} parent=1 // pred_region
      _
    $region17: #{tpu_custom_call.1} parent=1 // pred_fallthru
      _
    // Predicated region
    $region18: #{tpu_custom_call.1} parent=1 // pred_check
      _
    $region19: #{tpu_custom_call.1} parent=1 // pred_check_branch
      %22 = sbr.rel (0) target = $region21
    $region20: #{tpu_custom_call.1} parent=1 // pred_region
      _
    $region21: #{tpu_custom_call.1} parent=1 // pred_fallthru
      _
    // Predicated region
    $region22: #{tpu_custom_call.1} parent=1 // pred_check
      _
    $region23: #{tpu_custom_call.1} parent=1 // pred_check_branch
      %24 = sbr.rel (0) target = $region25
    $region24: #{tpu_custom_call.1} parent=1 // pred_region
      _
    $region25: #{tpu_custom_call.1} parent=1 // pred_fallthru
      _
    // Predicated region
    $region26: #{tpu_custom_call.1} parent=1 // pred_check
      _
    $region27: #{tpu_custom_call.1} parent=1 // pred_check_branch
      %26 = sbr.rel (0) target = $region29
    $region28: #{tpu_custom_call.1} parent=1 // pred_region
      _
    $region29: #{tpu_custom_call.1} parent=1 // pred_fallthru
      _
    %v27 = vld [vmem:[%s0] sm:$0xff]
    %v28 = vld [vmem:[%s0 + $0x8] sm:$0xff]
    %v29 = vld [vmem:[%s0 + $0x10] sm:$0xf]
    %v30 = vld [vmem:[%s1] sm:$0xff]
    %v31 = vld [vmem:[%s1 + $0x8] sm:$0xff]
    %v32 = vld [vmem:[%s1 + $0x10] sm:$0xff]
    %v33 = vld [vmem:[%s1 + $0x18] sm:$0xff]
    %v34 = vld [vmem:[%s1 + $0x20] sm:$0xff]
    %v35 = vld [vmem:[%s1 + $0x28] sm:$0xff]
    %v36 = vld [vmem:[%s1 + $0x30] sm:$0xff]
    %v37 = vld [vmem:[%s1 + $0x38] sm:$0xff]
    %v38 = vld [vmem:[%s2] sm:$0xff]
    %v39 = vld [vmem:[%s2 + $0x8] sm:$0xff]
    %v40 = vld [vmem:[%s2 + $0x10] sm:$0xff]
    %v41 = vld [vmem:[%s2 + $0x18] sm:$0xff]
    %v42 = vld [vmem:[%s2 + $0x20] sm:$0xff]
    %v43 = vld [vmem:[%s2 + $0x28] sm:$0xff]
    %v44 = vld [vmem:[%s2 + $0x30] sm:$0xff]
    %v45 = vld [vmem:[%s2 + $0x38] sm:$0xff]
    %47 = vset.pattern.permute.xlu0 0
    %48 = vperm.xlu0 %47, %v38
    %v49 = vpop.permute.xlu0 %48
    %52 = vset.pattern.permute.xlu0 0
    %53 = vperm.xlu0 %52, %v39
    %v54 = vpop.permute.xlu0 %53
    %57 = vset.pattern.permute.xlu0 0
    %58 = vperm.xlu0 %57, %v40
    %v59 = vpop.permute.xlu0 %58
    %62 = vset.pattern.permute.xlu0 0
    %63 = vperm.xlu0 %62, %v41
    %v64 = vpop.permute.xlu0 %63
    %67 = vset.pattern.permute.xlu0 0
    %68 = vperm.xlu0 %67, %v42
    %v69 = vpop.permute.xlu0 %68
    %72 = vset.pattern.permute.xlu0 0
    %73 = vperm.xlu0 %72, %v43
    %v74 = vpop.permute.xlu0 %73
    %77 = vset.pattern.permute.xlu0 0
    %78 = vperm.xlu0 %77, %v44
    %v79 = vpop.permute.xlu0 %78
    %82 = vset.pattern.permute.xlu0 0
    %83 = vperm.xlu0 %82, %v45
    %v84 = vpop.permute.xlu0 %83
    %vm86 = vcmask 162816
    %v88 = vsel %vm86, %v30, 0
    %v91 = vsel %vm86, %v31, 0
    %v94 = vsel %vm86, %v32, 0
    %v97 = vsel %vm86, %v33, 0
    %v100 = vsel %vm86, %v34, 0
    %v103 = vsel %vm86, %v35, 0
    %v106 = vsel %vm86, %v36, 0
    %v109 = vsel %vm86, %v37, 0
    %vm111 = vcmask 1043456
    %v113 = vsel %vm111, %v29, 0
    %115 = vmatprep.subr.mxu0 0.0
    %116 = vmatpush1.msra.mxu0 0.0
    %117 = vmatprep.subr.mxu0 0.0
    %118 = vmatpush1.msra.mxu0 0.0
    %119 = vmatprep.subr.mxu0 0.0
    %120 = vmatpush1.msra.mxu0 0.0
    %121 = vmatprep.subr.mxu0 0.0
    %122 = vmatpush1.msra.mxu0 0.0
    %123 = vmatprep.subr.mxu0 0.0
    %124 = vmatpush1.msra.mxu0 0.0
    %125 = vmatprep.subr.mxu0 0.0
    %126 = vmatpush1.msra.mxu0 0.0
    %127 = vmatprep.subr.mxu0 0.0
    %128 = vmatpush1.msra.mxu0 0.0
    %129 = vmatprep.subr.mxu0 0.0
    %130 = vmatpush1.msra.mxu0 0.0
    %131 = vmatprep.subr.mxu0 0.0
    %132 = vmatpush1.msra.mxu0 0.0
    %133 = vmatprep.subr.mxu0 0.0
    %134 = vmatpush1.msra.mxu0 0.0
    %135 = vmatprep.subr.mxu0 0.0
    %136 = vmatpush1.msra.mxu0 0.0
    %137 = vmatprep.subr.mxu0 0.0
    %138 = vmatpush1.msra.mxu0 0.0
    %139 = vmatprep.subr.mxu0 0.0
    %140 = vmatpush1.msra.mxu0 0.0
    %141 = vmatprep.subr.mxu0 0.0
    %142 = vmatpush1.msra.mxu0 %v113
    %143 = vmatprep.subr.mxu0 0.0
    %144 = vmatpush1.msra.mxu0 %v28
    %145 = vmatprep.subr.mxu0 0.0
    %146 = vmatpush1.msra.mxu0 %v27
    %147 = vmatprep.subr.mxu0 0.0
    %148 = vmatpush2.msra.mxu0 0.0
    %149 = vmatprep.subr.mxu0 0.0
    %150 = vmatpush2.msra.mxu0 0.0
    %151 = vmatprep.subr.mxu0 0.0
    %152 = vmatpush2.msra.mxu0 0.0
    %153 = vmatprep.subr.mxu0 0.0
    %154 = vmatpush2.msra.mxu0 0.0
    %155 = vmatprep.subr.mxu0 0.0
    %156 = vmatpush2.msra.mxu0 0.0
    %157 = vmatprep.subr.mxu0 0.0
    %158 = vmatpush2.msra.mxu0 0.0
    %159 = vmatprep.subr.mxu0 0.0
    %160 = vmatpush2.msra.mxu0 0.0
    %161 = vmatprep.subr.mxu0 0.0
    %162 = vmatpush2.msra.mxu0 0.0
    %163 = vmatprep.subr.mxu0 0.0
    %164 = vmatpush2.msra.mxu0 0.0
    %165 = vmatprep.subr.mxu0 0.0
    %166 = vmatpush2.msra.mxu0 0.0
    %167 = vmatprep.subr.mxu0 0.0
    %168 = vmatpush2.msra.mxu0 0.0
    %169 = vmatprep.subr.mxu0 0.0
    %170 = vmatpush2.msra.mxu0 0.0
    %171 = vmatprep.subr.mxu0 0.0
    %172 = vmatpush2.msra.mxu0 0.0
    %173 = vmatprep.subr.mxu0 0.0
    %174 = vmatpush2.msra.mxu0 0.0
    %175 = vmatprep.subr.mxu0 0.0
    %176 = vmatpush2.msra.mxu0 0.0
    %177 = vmatprep.subr.mxu0 0.0
    %178 = vmatpush2.msra.mxu0 0.0
    %179 = vmatprep.mubr.f32.mxu0 0.0
    %180 = vmatmul.mubr.f32.gmra.mxu0 %v88
    %v181 = vpop.f32.mrf.mxu0
    %v182 = vadd.f32 %v49, %v181
    %v183 = vpop.f32.mrf.mxu0
    %184 = vmatprep.mubr.f32.mxu0 0.0
    %185 = vmatmul.mubr.f32.gmra.mxu0 %v91
    %v186 = vpop.f32.mrf.mxu0
    %v187 = vadd.f32 %v54, %v186
    %v188 = vpop.f32.mrf.mxu0
    %189 = vmatprep.mubr.f32.mxu0 0.0
    %190 = vmatmul.mubr.f32.gmra.mxu0 %v94
    %v191 = vpop.f32.mrf.mxu0
    %v192 = vadd.f32 %v59, %v191
    %v193 = vpop.f32.mrf.mxu0
    %194 = vmatprep.mubr.f32.mxu0 0.0
    %195 = vmatmul.mubr.f32.gmra.mxu0 %v97
    %v196 = vpop.f32.mrf.mxu0
    %v197 = vadd.f32 %v64, %v196
    %v198 = vpop.f32.mrf.mxu0
    %199 = vmatprep.mubr.f32.mxu0 0.0
    %200 = vmatmul.mubr.f32.gmra.mxu0 %v100
    %v201 = vpop.f32.mrf.mxu0
    %v202 = vadd.f32 %v69, %v201
    %v203 = vpop.f32.mrf.mxu0
    %204 = vmatprep.mubr.f32.mxu0 0.0
    %205 = vmatmul.mubr.f32.gmra.mxu0 %v103
    %v206 = vpop.f32.mrf.mxu0
    %v207 = vadd.f32 %v74, %v206
    %v208 = vpop.f32.mrf.mxu0
    %209 = vmatprep.mubr.f32.mxu0 0.0
    %210 = vmatmul.mubr.f32.gmra.mxu0 %v106
    %v211 = vpop.f32.mrf.mxu0
    %v212 = vadd.f32 %v79, %v211
    %v213 = vpop.f32.mrf.mxu0
    %214 = vmatprep.mubr.f32.mxu0 0.0
    %215 = vmatmul.mubr.f32.gmra.mxu0 %v109
    %v216 = vpop.f32.mrf.mxu0
    %v217 = vadd.f32 %v84, %v216
    %v218 = vpop.f32.mrf.mxu0
    %219 = vdwg.mxu0
    %v220 = vmax.f32 %v182, 0.0
    %v221 = vmax.f32 %v187, 0.0
    %v222 = vmax.f32 %v192, 0.0
    %v223 = vmax.f32 %v197, 0.0
    %v224 = vmax.f32 %v202, 0.0
    %v225 = vmax.f32 %v207, 0.0
    %v226 = vmax.f32 %v212, 0.0
    %v227 = vmax.f32 %v217, 0.0
    %v228 = vld [vmem:[%s3] sm:$0xff]
    %v229 = vld [vmem:[%s3 + $0x8] sm:$0xff]
    %v230 = vld [vmem:[%s3 + $0x10] sm:$0xff]
    %v231 = vld [vmem:[%s3 + $0x18] sm:$0xff]
    %v232 = vld [vmem:[%s4] sm:$0xff]
    %v233 = vld [vmem:[%s4 + $0x8] sm:$0xff]
    %v234 = vld [vmem:[%s4 + $0x10] sm:$0xff]
    %v235 = vld [vmem:[%s4 + $0x18] sm:$0xff]
    %237 = vset.pattern.permute.xlu0 0
    %238 = vperm.xlu0 %237, %v232
    %v239 = vpop.permute.xlu0 %238
    %242 = vset.pattern.permute.xlu0 0
    %243 = vperm.xlu0 %242, %v233
    %v244 = vpop.permute.xlu0 %243
    %247 = vset.pattern.permute.xlu0 0
    %248 = vperm.xlu0 %247, %v234
    %v249 = vpop.permute.xlu0 %248
    %252 = vset.pattern.permute.xlu0 0
    %253 = vperm.xlu0 %252, %v235
    %v254 = vpop.permute.xlu0 %253
    %vm256 = vcmask 523264
    %v258 = vsel %vm256, %v228, 0
    %v261 = vsel %vm256, %v229, 0
    %v264 = vsel %vm256, %v230, 0
    %v267 = vsel %vm256, %v231, 0
    %269 = vmatprep.subr.mxu0 0.0
    %270 = vmatpush1.msra.mxu0 0.0
    %271 = vmatprep.subr.mxu0 0.0
    %272 = vmatpush1.msra.mxu0 0.0
    %273 = vmatprep.subr.mxu0 0.0
    %274 = vmatpush1.msra.mxu0 0.0
    %275 = vmatprep.subr.mxu0 0.0
    %276 = vmatpush1.msra.mxu0 0.0
    %277 = vmatprep.subr.mxu0 0.0
    %278 = vmatpush1.msra.mxu0 0.0
    %279 = vmatprep.subr.mxu0 0.0
    %280 = vmatpush1.msra.mxu0 0.0
    %281 = vmatprep.subr.mxu0 0.0
    %282 = vmatpush1.msra.mxu0 0.0
    %283 = vmatprep.subr.mxu0 0.0
    %284 = vmatpush1.msra.mxu0 0.0
    %285 = vmatprep.subr.mxu0 0.0
    %286 = vmatpush1.msra.mxu0 %v227
    %287 = vmatprep.subr.mxu0 0.0
    %288 = vmatpush1.msra.mxu0 %v226
    %289 = vmatprep.subr.mxu0 0.0
    %290 = vmatpush1.msra.mxu0 %v225
    %291 = vmatprep.subr.mxu0 0.0
    %292 = vmatpush1.msra.mxu0 %v224
    %293 = vmatprep.subr.mxu0 0.0
    %294 = vmatpush1.msra.mxu0 %v223
    %295 = vmatprep.subr.mxu0 0.0
    %296 = vmatpush1.msra.mxu0 %v222
    %297 = vmatprep.subr.mxu0 0.0
    %298 = vmatpush1.msra.mxu0 %v221
    %299 = vmatprep.subr.mxu0 0.0
    %300 = vmatpush1.msra.mxu0 %v220
    %301 = vmatprep.subr.mxu0 0.0
    %302 = vmatpush2.msra.mxu0 0.0
    %303 = vmatprep.subr.mxu0 0.0
    %304 = vmatpush2.msra.mxu0 0.0
    %305 = vmatprep.subr.mxu0 0.0
    %306 = vmatpush2.msra.mxu0 0.0
    %307 = vmatprep.subr.mxu0 0.0
    %308 = vmatpush2.msra.mxu0 0.0
    %309 = vmatprep.subr.mxu0 0.0
    %310 = vmatpush2.msra.mxu0 0.0
    %311 = vmatprep.subr.mxu0 0.0
    %312 = vmatpush2.msra.mxu0 0.0
    %313 = vmatprep.subr.mxu0 0.0
    %314 = vmatpush2.msra.mxu0 0.0
    %315 = vmatprep.subr.mxu0 0.0
    %316 = vmatpush2.msra.mxu0 0.0
    %317 = vmatprep.subr.mxu0 0.0
    %318 = vmatpush2.msra.mxu0 0.0
    %319 = vmatprep.subr.mxu0 0.0
    %320 = vmatpush2.msra.mxu0 0.0
    %321 = vmatprep.subr.mxu0 0.0
    %322 = vmatpush2.msra.mxu0 0.0
    %323 = vmatprep.subr.mxu0 0.0
    %324 = vmatpush2.msra.mxu0 0.0
    %325 = vmatprep.subr.mxu0 0.0
    %326 = vmatpush2.msra.mxu0 0.0
    %327 = vmatprep.subr.mxu0 0.0
    %328 = vmatpush2.msra.mxu0 0.0
    %329 = vmatprep.subr.mxu0 0.0
    %330 = vmatpush2.msra.mxu0 0.0
    %331 = vmatprep.subr.mxu0 0.0
    %332 = vmatpush2.msra.mxu0 0.0
    %333 = vmatprep.mubr.f32.mxu0 0.0
    %334 = vmatmul.mubr.f32.gmra.mxu0 %v258
    %v335 = vpop.f32.mrf.mxu0
    %v336 = vadd.f32 %v239, %v335
    %v337 = vpop.f32.mrf.mxu0
    %338 = vmatprep.mubr.f32.mxu0 0.0
    %339 = vmatmul.mubr.f32.gmra.mxu0 %v261
    %v340 = vpop.f32.mrf.mxu0
    %v341 = vadd.f32 %v244, %v340
    %v342 = vpop.f32.mrf.mxu0
    %343 = vmatprep.mubr.f32.mxu0 0.0
    %344 = vmatmul.mubr.f32.gmra.mxu0 %v264
    %v345 = vpop.f32.mrf.mxu0
    %v346 = vadd.f32 %v249, %v345
    %v347 = vpop.f32.mrf.mxu0
    %348 = vmatprep.mubr.f32.mxu0 0.0
    %349 = vmatmul.mubr.f32.gmra.mxu0 %v267
    %v350 = vpop.f32.mrf.mxu0
    %v351 = vadd.f32 %v254, %v350
    %v352 = vpop.f32.mrf.mxu0
    %353 = vdwg.mxu0
    %v354 = vmax.f32 %v336, 0.0
    %v355 = vmax.f32 %v341, 0.0
    %v356 = vmax.f32 %v346, 0.0
    %v357 = vmax.f32 %v351, 0.0
    %v358 = vld [vmem:[%s5] sm:$0xff]
    %v359 = vld [vmem:[%s5 + $0x8] sm:$0xff]
    %v360 = vld [vmem:[%s6] sm:$0xff]
    %v361 = vld [vmem:[%s6 + $0x8] sm:$0xff]
    %363 = vset.pattern.permute.xlu0 0
    %364 = vperm.xlu0 %363, %v360
    %v365 = vpop.permute.xlu0 %364
    %368 = vset.pattern.permute.xlu0 0
    %369 = vperm.xlu0 %368, %v361
    %v370 = vpop.permute.xlu0 %369
    %vm372 = vcmask 261120
    %v374 = vsel %vm372, %v358, 0
    %v377 = vsel %vm372, %v359, 0
    %379 = vmatprep.subr.mxu0 0.0
    %380 = vmatpush1.msra.mxu0 0.0
    %381 = vmatprep.subr.mxu0 0.0
    %382 = vmatpush1.msra.mxu0 0.0
    %383 = vmatprep.subr.mxu0 0.0
    %384 = vmatpush1.msra.mxu0 0.0
    %385 = vmatprep.subr.mxu0 0.0
    %386 = vmatpush1.msra.mxu0 0.0
    %387 = vmatprep.subr.mxu0 0.0
    %388 = vmatpush1.msra.mxu0 0.0
    %389 = vmatprep.subr.mxu0 0.0
    %390 = vmatpush1.msra.mxu0 0.0
    %391 = vmatprep.subr.mxu0 0.0
    %392 = vmatpush1.msra.mxu0 0.0
    %393 = vmatprep.subr.mxu0 0.0
    %394 = vmatpush1.msra.mxu0 0.0
    %395 = vmatprep.subr.mxu0 0.0
    %396 = vmatpush1.msra.mxu0 0.0
    %397 = vmatprep.subr.mxu0 0.0
    %398 = vmatpush1.msra.mxu0 0.0
    %399 = vmatprep.subr.mxu0 0.0
    %400 = vmatpush1.msra.mxu0 0.0
    %401 = vmatprep.subr.mxu0 0.0
    %402 = vmatpush1.msra.mxu0 0.0
    %403 = vmatprep.subr.mxu0 0.0
    %404 = vmatpush1.msra.mxu0 %v357
    %405 = vmatprep.subr.mxu0 0.0
    %406 = vmatpush1.msra.mxu0 %v356
    %407 = vmatprep.subr.mxu0 0.0
    %408 = vmatpush1.msra.mxu0 %v355
    %409 = vmatprep.subr.mxu0 0.0
    %410 = vmatpush1.msra.mxu0 %v354
    %411 = vmatprep.subr.mxu0 0.0
    %412 = vmatpush2.msra.mxu0 0.0
    %413 = vmatprep.subr.mxu0 0.0
    %414 = vmatpush2.msra.mxu0 0.0
    %415 = vmatprep.subr.mxu0 0.0
    %416 = vmatpush2.msra.mxu0 0.0
    %417 = vmatprep.subr.mxu0 0.0
    %418 = vmatpush2.msra.mxu0 0.0
    %419 = vmatprep.subr.mxu0 0.0
    %420 = vmatpush2.msra.mxu0 0.0
    %421 = vmatprep.subr.mxu0 0.0
    %422 = vmatpush2.msra.mxu0 0.0
    %423 = vmatprep.subr.mxu0 0.0
    %424 = vmatpush2.msra.mxu0 0.0
    %425 = vmatprep.subr.mxu0 0.0
    %426 = vmatpush2.msra.mxu0 0.0
    %427 = vmatprep.subr.mxu0 0.0
    %428 = vmatpush2.msra.mxu0 0.0
    %429 = vmatprep.subr.mxu0 0.0
    %430 = vmatpush2.msra.mxu0 0.0
    %431 = vmatprep.subr.mxu0 0.0
    %432 = vmatpush2.msra.mxu0 0.0
    %433 = vmatprep.subr.mxu0 0.0
    %434 = vmatpush2.msra.mxu0 0.0
    %435 = vmatprep.subr.mxu0 0.0
    %436 = vmatpush2.msra.mxu0 0.0
    %437 = vmatprep.subr.mxu0 0.0
    %438 = vmatpush2.msra.mxu0 0.0
    %439 = vmatprep.subr.mxu0 0.0
    %440 = vmatpush2.msra.mxu0 0.0
    %441 = vmatprep.subr.mxu0 0.0
    %442 = vmatpush2.msra.mxu0 0.0
    %443 = vmatprep.mubr.f32.mxu0 0.0
    %444 = vmatmul.mubr.f32.gmra.mxu0 %v374
    %v445 = vpop.f32.mrf.mxu0
    %v446 = vadd.f32 %v365, %v445
    %v447 = vpop.f32.mrf.mxu0
    %448 = vmatprep.mubr.f32.mxu0 0.0
    %449 = vmatmul.mubr.f32.gmra.mxu0 %v377
    %v450 = vpop.f32.mrf.mxu0
    %v451 = vadd.f32 %v370, %v450
    %v452 = vpop.f32.mrf.mxu0
    %453 = vdwg.mxu0
    %454 = vst [vmem:[#allocation2] sm:$0xff] %v446
    %455 = vst [vmem:[#allocation2 + $0x8] sm:$0xff] %v451
    // Predicated region
    $region30: #{tpu_custom_call.1} parent=1 // pred_check
      _
    $region31: #{tpu_custom_call.1} parent=1 // pred_check_branch
      %457 = sbr.rel (0) target = $region33
    $region32: #{tpu_custom_call.1} parent=1 // pred_region
      %s459 = ssub.s32 256, 256
      %460 = vsyncadd [#allocation3], %s459
      %s461 = sshll.u32 [#allocation2], 4
      %s462 = int_to_ptr.vmem [resolvable:$true] %s461
      %467 = dma.vmem_to_hbm [thread:$0]  %s462, 256, %s7, [#allocation3], 128, 128, 8
    $region33: #{tpu_custom_call.1} parent=1 // pred_fallthru
      _
    // Predicated region
    $region34: #{tpu_custom_call.1} parent=1 // pred_check
      _
    $region35: #{tpu_custom_call.1} parent=1 // pred_check_branch
      %469 = sbr.rel (0) target = $region37
    $region36: #{tpu_custom_call.1} parent=1 // pred_region
      %470 = dma.done [#allocation3], 256
    $region37: #{tpu_custom_call.1} parent=1 // pred_fallthru
      _
    %471 = vsyncpa [#allocation3], 1

</llo_original>
